<compile_context>
chip_gen: v6e
topology: v6e:2x2x1
jax: 0.10.0
libtpu: 0.0.40
codegen_flags: <defaults>
</compile_context>

<pallas_src>
import numpy as np
import jax
import jax.numpy as jnp
from jax.experimental import pallas as pl
from jax.experimental.pallas import tpu as pltpu


# --------------------------------------------------------------------------- #
# helpers
# --------------------------------------------------------------------------- #
def _round_up(x, m):
    return ((x + m - 1) // m) * m


def _fit_tile(dim, pref, align):
    """Largest t <= pref with t % align == 0 and dim % t == 0, else the full dim."""
    if dim <= pref:
        return dim
    t = (pref // align) * align
    while t >= align:
        if dim % t == 0:
            return t
        t -= align
    return dim


def _vmem_limit_bytes():
    """Per-generation scoped-VMEM limit: v5e/v6e have 128 MiB physical, v7x 64 MiB."""
    try:
        phys = int(pltpu.get_tpu_info().vmem_capacity_bytes)
    except Exception:
        phys = 64 * 1024 * 1024            # conservative default (v7x-sized)
    return max(32 * 1024 * 1024, min(phys - 16 * 1024 * 1024, 100 * 1024 * 1024))


def _tile_footprint_bytes(tm, tk, tn, csz, osz):
    """Double-buffered x/w/bias/out tiles + (worst case) the f32 accumulator."""
    return (2 * (tm * tk + tk * tn) * csz      # x, w (compute dtype)
            + 2 * tn * 4                        # bias (f32)
            + 2 * tm * tn * osz                 # output tile
            + tm * tn * 4)                      # accumulator scratch


def _pick_tk(in_feat, tm, tn, csz, osz, budget):
    """Prefer full-K (single reduction step, no accumulator) when it fits VMEM."""
    if in_feat % 128 != 0 or _tile_footprint_bytes(tm, in_feat, tn, csz, osz) <= budget:
        return in_feat
    best = min(128, in_feat)
    for cand in range(128, in_feat, 128):
        if in_feat % cand == 0 and _tile_footprint_bytes(tm, cand, tn, csz, osz) <= budget:
            best = cand
    return best


# --------------------------------------------------------------------------- #
# kernel
# --------------------------------------------------------------------------- #
def _make_fmoe_kernel(tm, single_k):
    def kernel(mt_ref, eid_ref, lo_ref, hi_ref,    # scalar prefetch (SMEM)
               x_ref, w_ref, b_ref,                # VMEM tiles
               o_ref,                              # output tile
               *scratch):                          # (acc,) only when k_steps > 1
        # NOTE: program_id / num_programs are intentionally read at the top
        # level of the kernel (never inside a pl.when body) — inside a cond
        # branch they cannot be substituted by the grid environment.
        t = pl.program_id(1)
        lo = lo_ref[t]                 # first valid row of this tile (tile-local)
        hi = hi_ref[t]                 # one-past-last valid row (tile-local)

        # x: (tm, tk) @ w: (tk, tn) — weights pre-transposed to [K, N], so the
        # MXU RHS needs no in-kernel transpose; accumulate in f32.
        part = jnp.dot(x_ref[...], w_ref[...], preferred_element_type=jnp.float32)

        def store(acc_f32):
            res = (acc_f32 + b_ref[...]).astype(o_ref.dtype)
            is_full = jnp.logical_and(lo == 0, hi == tm)

            # Interior tiles (common case): plain lane-dense store — no mask,
            # no read-back of the output block.
            @pl.when(is_full)
            def _interior():
                o_ref[...] = res

            # Expert-boundary / padded-tail tiles: merge only the valid rows.
            # Consecutive grid steps that share a token tile map to the SAME
            # output block, so rows written by the previous expert are still
            # resident in VMEM.  The (tm, 1) mask broadcasts across lanes.
            @pl.when(jnp.logical_not(is_full))
            def _boundary():
                row = jax.lax.broadcasted_iota(jnp.int32, (tm, 1), 0)
                valid = jnp.logical_and(row >= lo, row < hi)
                o_ref[...] = jnp.where(valid, res, o_ref[...])

        if single_k:
            # Full-K: no accumulator round-trips, no init/finalize phases.
            store(part)
        else:
            k = pl.program_id(2)
            last_k = pl.num_programs(2) - 1
            acc_ref = scratch[0]

            @pl.when(k == 0)
            def _init():
                acc_ref[...] = jnp.zeros_like(acc_ref)

            acc_ref[...] += part

            @pl.when(k == last_k)
            def _finalize():
                store(acc_ref[...])

    return kernel


# --------------------------------------------------------------------------- #
# wrappers
# --------------------------------------------------------------------------- #
def prepare_expert_params(weight, bias=None, compute_dtype=jnp.bfloat16):
    """One-time parameter prep (do at module init, NOT per forward call):
    [E, out_feat, in_feat] -> [E, in_feat, out_feat] (MXU RHS is already [K, N]),
    optionally quantized to bf16.  Accumulation inside the kernel stays f32."""
    num_expert, out_feat, in_feat = weight.shape
    wt = jnp.swapaxes(weight, 1, 2).astype(compute_dtype)
    if bias is None:
        bias = jnp.zeros((num_expert, out_feat), jnp.float32)
    bias3 = jnp.asarray(bias, jnp.float32).reshape(num_expert, 1, out_feat)
    return wt, bias3


def fmoe_linear(inp, fwd_expert_count, wt, bias3, *, tm=None, tn=512, tk=None):
    """Grouped expert linear (FMoELinear.forward / MOELinear.apply), forward only.
    `wt`/`bias3` come from prepare_expert_params (wt is [E, in_feat, out_feat])."""
    counts = np.asarray(fwd_expert_count).astype(np.int64)   # concrete, like FastMoE
    num_expert, in_feat, out_feat = wt.shape
    total = int(counts.sum())
    assert inp.shape == (total, in_feat)
    assert total > 0

    compute_dtype = wt.dtype
    csz = jnp.dtype(compute_dtype).itemsize
    osz = jnp.dtype(inp.dtype).itemsize

    # ---- tile sizes (respect the (sublane=8, lane=128) layout constraints) ----
    # tm from the concrete counts: large counts -> big tiles (weight HBM traffic
    # scales as 1/tm); decode-like counts -> small tiles (avoid masked waste).
    if tm is None:
        tm = int(min(512, max(8, _round_up(int(counts.max()), 8))))
    else:
        tm = _round_up(max(8, int(tm)), 8)

    tn = _fit_tile(out_feat, tn, 128)
    if out_feat // tn < 2:          # give megacore (v7x) >= 2 lane tiles when possible
        half = _fit_tile(out_feat, max(256, out_feat // 2), 128)
        if 256 <= half < out_feat:
            tn = half

    vmem_limit = _vmem_limit_bytes()
    if tk is None:
        tk = _pick_tk(in_feat, tm, tn, csz, osz, vmem_limit - 8 * 1024 * 1024)
    else:
        tk = _fit_tile(in_feat, int(tk), 128)
    k_steps = in_feat // tk
    single_k = k_steps == 1

    m_pad = _round_up(total, tm)

    # ---- per-logical-step metadata, consumed by data-dependent index_maps ----
    offsets = np.concatenate([[0], np.cumsum(counts)])
    m_tiles, e_ids, lo_loc, hi_loc = [], [], [], []
    for e in range(num_expert):
        lo, hi = int(offsets[e]), int(offsets[e + 1])
        if hi == lo:
            continue                                   # zero-count expert: skipped
        for mt in range(lo // tm, (hi - 1) // tm + 1):
            m_tiles.append(mt)
            e_ids.append(e)
            lo_loc.append(max(lo, mt * tm) - mt * tm)  # tile-local valid row range
            hi_loc.append(min(hi, (mt + 1) * tm) - mt * tm)
    n_steps = len(m_tiles)
    m_tiles = jnp.asarray(m_tiles, jnp.int32)
    e_ids = jnp.asarray(e_ids, jnp.int32)
    lo_loc = jnp.asarray(lo_loc, jnp.int32)
    hi_loc = jnp.asarray(hi_loc, jnp.int32)

    # Cast activations once to the compute dtype; pad only the token-axis tail
    # (<= tm-1 zero rows).  No per-expert pad/concat and no output row gather.
    # TODO(synk): in a real model keep activations already in bf16 and reuse a
    # pre-padded buffer so neither copy happens per call.
    x = inp.astype(compute_dtype)
    if m_pad != total:
        x = jnp.pad(x, ((0, m_pad - total), (0, 0)))

    grid_n = out_feat // tn
    grid = (grid_n, n_steps, k_steps)

    grid_spec = pltpu.PrefetchScalarGridSpec(
        num_scalar_prefetch=4,
        grid=grid,
        in_specs=[
            # activation tile of the (tail-padded) token axis
            pl.BlockSpec((tm, tk), lambda n, t, k, mt, eid, lo, hi: (mt[t], k)),
            # expert weight tile [K, N], selected by the prefetched expert id
            pl.BlockSpec((None, tk, tn), lambda n, t, k, mt, eid, lo, hi: (eid[t], k, n)),
            # expert bias tile
            pl.BlockSpec((None, 1, tn), lambda n, t, k, mt, eid, lo, hi: (eid[t], 0, n)),
        ],
        out_specs=pl.BlockSpec((tm, tn), lambda n, t, k, mt, eid, lo, hi: (mt[t], n)),
        scratch_shapes=[] if single_k else [pltpu.VMEM((tm, tn), jnp.float32)],
    )

    # Advisory cost: weights stream once per (n, t) pass; activations once per step.
    cost = pl.CostEstimate(
        flops=2 * grid_n * n_steps * tm * in_feat * tn,
        transcendentals=0,
        bytes_accessed=(grid_n * n_steps * tm * in_feat * csz      # activations
                        + grid_n * n_steps * in_feat * tn * csz    # expert weights
                        + grid_n * n_steps * tn * 4                # bias
                        + grid_n * n_steps * tm * tn * osz),       # output
    )

    out_pad = pl.pallas_call(
        _make_fmoe_kernel(tm, single_k),
        out_shape=jax.ShapeDtypeStruct((m_pad, out_feat), inp.dtype),
        grid_spec=grid_spec,
        compiler_params=pltpu.CompilerParams(
            # N tiles are independent -> megacore-parallel; the token-tile axis
            # must stay ordered (consecutive boundary-tile merges share a
            # resident output block); K is the reduction axis.
            dimension_semantics=("parallel", "arbitrary", "arbitrary"),
            vmem_limit_bytes=vmem_limit,
        ),
        cost_estimate=cost,
    )(m_tiles, e_ids, lo_loc, hi_loc, x, wt, bias3)

    return out_pad if m_pad == total else out_pad[:total]


def fmoe_linear_forward(inp, fwd_expert_count, weight, bias=None,
                        compute_dtype=jnp.bfloat16, **kwargs):
    """Convenience wrapper mirroring FMoELinear.forward (weight = [E, out, in]).
    Real deployments should call prepare_expert_params once at init instead."""
    wt, bias3 = prepare_expert_params(weight, bias, compute_dtype)
    return fmoe_linear(inp, fwd_expert_count, wt, bias3, **kwargs)


# --------------------------------------------------------------------------- #
# self-test
# --------------------------------------------------------------------------- #
def _reference(inp, counts, weight, bias):
    outs, off = [], 0
    for e, c in enumerate(counts):
        if c == 0:
            continue
        outs.append(inp[off:off + c] @ weight[e].T + bias[e])
        off += c
    return jnp.concatenate(outs, axis=0)


if __name__ == "__main__":
    num_expert, in_feat, out_feat = 4, 512, 384
    counts = [10, 0, 7, 15]           # fwd_expert_count (tokens per expert)
    total = sum(counts)

    key = jax.random.PRNGKey(0)
    k_x, k_w, k_b = jax.random.split(key, 3)

    # Small-integer-valued test data: every product and partial sum is exactly
    # representable in bf16/f32, so the bf16 compute path matches the f32
    # reference tightly regardless of the backend's matmul precision mode.
    inp = jnp.round(jax.random.normal(k_x, (total, in_feat)) * 2.0).astype(jnp.float32)
    weight = jax.random.randint(k_w, (num_expert, out_feat, in_feat), -3, 4).astype(jnp.float32)
    bias = jnp.round(jax.random.normal(k_b, (num_expert, out_feat)) * 2.0).astype(jnp.float32)
    fwd_expert_count = np.asarray(counts, dtype=np.int64)

    ref = _reference(inp, counts, weight, bias)

    # One-time parameter prep ([E, K, N] layout + bf16), then the forward pass.
    wt, bias3 = prepare_expert_params(weight, bias, compute_dtype=jnp.bfloat16)

    # Default tiles: tm derived from the counts, full-K single-step path.
    out = jax.block_until_ready(fmoe_linear(inp, fwd_expert_count, wt, bias3))
    assert out.shape == (total, out_feat)
    np.testing.assert_allclose(np.asarray(out), np.asarray(ref), rtol=1e-5, atol=1e-5)

    # Small forced tiles: exercises K accumulation + accumulator scratch, N
    # tiling, expert-boundary tiles straddling token tiles, and the zero-count
    # expert.
    out2 = jax.block_until_ready(
        fmoe_linear(inp, fwd_expert_count, wt, bias3, tm=8, tn=128, tk=256))
    np.testing.assert_allclose(np.asarray(out2), np.asarray(ref), rtol=1e-5, atol=1e-5)

    print("KERNEL_OK")
</pallas_src>

<mosaic_0001>
module attributes {stable_mosaic.version = 11 : i64} {
  func.func @kernel(%arg0: i32, %arg1: i32, %arg2: i32, %arg3: memref<4xi32, #tpu.memory_space<smem>>, %arg4: memref<4xi32, #tpu.memory_space<smem>>, %arg5: memref<4xi32, #tpu.memory_space<smem>>, %arg6: memref<4xi32, #tpu.memory_space<smem>>, %arg7: memref<16x512xbf16, #tpu.memory_space<vmem>>, %arg8: memref<1x512x384xbf16, #tpu.memory_space<vmem>>, %arg9: memref<1x1x384xf32, #tpu.memory_space<vmem>>, %arg10: memref<16x384xf32, #tpu.memory_space<vmem>>) attributes {dimension_semantics = [#tpu.dimension_semantics<parallel>, #tpu.dimension_semantics<arbitrary>, #tpu.dimension_semantics<arbitrary>], iteration_bounds = array<i64: 1, 4, 1>, scalar_prefetch = 4 : i64, scratch_operands = 0 : i64, tpu.core_type = #tpu.core_type<tc>, window_params = [{transform_indices = @transform_0, window_bounds = array<i64: 16, 512>}, {transform_indices = @transform_1, window_bounds = array<i64: 1, 512, 384>}, {transform_indices = @transform_2, window_bounds = array<i64: 1, 1, 384>}, {transform_indices = @transform_3, window_bounds = array<i64: 16, 384>}]} {
    %0 = arith.index_cast %arg1 : i32 to index
    %1 = memref.load %arg5[%0] : memref<4xi32, #tpu.memory_space<smem>>
    %2 = arith.index_cast %arg1 : i32 to index
    %3 = memref.load %arg6[%2] : memref<4xi32, #tpu.memory_space<smem>>
    %c0 = arith.constant 0 : index
    %c0_0 = arith.constant 0 : index
    %4 = vector.load %arg7[%c0, %c0_0] : memref<16x512xbf16, #tpu.memory_space<vmem>>, vector<16x512xbf16>
    %c0_1 = arith.constant 0 : index
    %c0_2 = arith.constant 0 : index
    %c0_3 = arith.constant 0 : index
    %5 = vector.load %arg8[%c0_1, %c0_2, %c0_3] : memref<1x512x384xbf16, #tpu.memory_space<vmem>>, vector<1x512x384xbf16>
    %6 = vector.shape_cast %5 : vector<1x512x384xbf16> to vector<512x384xbf16>
    %cst = arith.constant dense<0.000000e+00> : vector<16x384xf32>
    %7 = tpu.matmul %4, %6, %cst {dimension_numbers = #tpu.dot_dimension_numbers<[1], [0], [0], [1], [0, 0, 1, 1], [], []>} : vector<16x512xbf16>, vector<512x384xbf16>, vector<16x384xf32> -> vector<16x384xf32>
    %c0_4 = arith.constant 0 : index
    %c0_5 = arith.constant 0 : index
    %c0_6 = arith.constant 0 : index
    %8 = vector.load %arg9[%c0_4, %c0_5, %c0_6] : memref<1x1x384xf32, #tpu.memory_space<vmem>>, vector<1x1x384xf32>
    %9 = vector.shape_cast %8 : vector<1x1x384xf32> to vector<1x384xf32>
    %10 = vector.broadcast %9 : vector<1x384xf32> to vector<16x384xf32>
    %11 = arith.addf %7, %10 : vector<16x384xf32>
    %c0_i32 = arith.constant 0 : i32
    %12 = arith.cmpi eq, %1, %c0_i32 : i32
    %c16_i32 = arith.constant 16 : i32
    %13 = arith.cmpi eq, %3, %c16_i32 : i32
    %14 = arith.andi %12, %13 : i1
    %15 = arith.extui %14 : i1 to i32
    %c0_i32_7 = arith.constant 0 : i32
    %16 = arith.cmpi ne, %15, %c0_i32_7 : i32
    scf.if %16 {
      %c0_9 = arith.constant 0 : index
      %c0_10 = arith.constant 0 : index
      %20 = vector.load %arg10[%c0_9, %c0_10] : memref<16x384xf32, #tpu.memory_space<vmem>>, vector<16x384xf32>
      tpu.vector_store %arg10[%c0_9, %c0_10], %11 {strides = array<i32>} : memref<16x384xf32, #tpu.memory_space<vmem>>, vector<16x384xf32>,
    } else {
    }
    %true = arith.constant true
    %17 = arith.xori %14, %true : i1
    %18 = arith.extui %17 : i1 to i32
    %c0_i32_8 = arith.constant 0 : i32
    %19 = arith.cmpi ne, %18, %c0_i32_8 : i32
    scf.if %19 {
      %20 = tpu.iota {dimensions = array<i32: 0>} : vector<16x1xi32>
      %21 = vector.broadcast %1 : i32 to vector<16x1xi32>
      %22 = arith.cmpi sge, %20, %21 : vector<16x1xi32>
      %23 = vector.broadcast %3 : i32 to vector<16x1xi32>
      %24 = arith.cmpi slt, %20, %23 : vector<16x1xi32>
      %25 = arith.andi %22, %24 : vector<16x1xi1>
      %c0_9 = arith.constant 0 : index
      %c0_10 = arith.constant 0 : index
      %26 = vector.load %arg10[%c0_9, %c0_10] : memref<16x384xf32, #tpu.memory_space<vmem>>, vector<16x384xf32>
      %27 = vector.shape_cast %25 : vector<16x1xi1> to vector<16x1xi1>
      %28 = vector.broadcast %27 : vector<16x1xi1> to vector<16x384xi1>
      %29 = arith.select %28, %11, %26 : vector<16x384xi1>, vector<16x384xf32>
      %c0_11 = arith.constant 0 : index
      %c0_12 = arith.constant 0 : index
      %30 = vector.load %arg10[%c0_11, %c0_12] : memref<16x384xf32, #tpu.memory_space<vmem>>, vector<16x384xf32>
      tpu.vector_store %arg10[%c0_11, %c0_12], %29 {strides = array<i32>} : memref<16x384xf32, #tpu.memory_space<vmem>>, vector<16x384xf32>,
    } else {
    }
    return
  }
  func.func @transform_0(%arg0: i32, %arg1: i32, %arg2: i32, %arg3: memref<4xi32, #tpu.memory_space<smem>>, %arg4: memref<4xi32, #tpu.memory_space<smem>>, %arg5: memref<4xi32, #tpu.memory_space<smem>>, %arg6: memref<4xi32, #tpu.memory_space<smem>>) -> (i32, i32) {
    %0 = arith.index_cast %arg1 : i32 to index
    %1 = memref.load %arg3[%0] : memref<4xi32, #tpu.memory_space<smem>>
    %c0_i32 = arith.constant 0 : i32
    return %1, %arg2 : i32, i32
  }
  func.func @transform_1(%arg0: i32, %arg1: i32, %arg2: i32, %arg3: memref<4xi32, #tpu.memory_space<smem>>, %arg4: memref<4xi32, #tpu.memory_space<smem>>, %arg5: memref<4xi32, #tpu.memory_space<smem>>, %arg6: memref<4xi32, #tpu.memory_space<smem>>) -> (i32, i32, i32) {
    %0 = arith.index_cast %arg1 : i32 to index
    %1 = memref.load %arg4[%0] : memref<4xi32, #tpu.memory_space<smem>>
    %c0_i32 = arith.constant 0 : i32
    return %1, %arg2, %arg0 : i32, i32, i32
  }
  func.func @transform_2(%arg0: i32, %arg1: i32, %arg2: i32, %arg3: memref<4xi32, #tpu.memory_space<smem>>, %arg4: memref<4xi32, #tpu.memory_space<smem>>, %arg5: memref<4xi32, #tpu.memory_space<smem>>, %arg6: memref<4xi32, #tpu.memory_space<smem>>) -> (i32, i32, i32) {
    %0 = arith.index_cast %arg1 : i32 to index
    %1 = memref.load %arg4[%0] : memref<4xi32, #tpu.memory_space<smem>>
    %c0_i32 = arith.constant 0 : i32
    %c0_i32_0 = arith.constant 0 : i32
    return %1, %c0_i32, %arg0 : i32, i32, i32
  }
  func.func @transform_3(%arg0: i32, %arg1: i32, %arg2: i32, %arg3: memref<4xi32, #tpu.memory_space<smem>>, %arg4: memref<4xi32, #tpu.memory_space<smem>>, %arg5: memref<4xi32, #tpu.memory_space<smem>>, %arg6: memref<4xi32, #tpu.memory_space<smem>>) -> (i32, i32) {
    %0 = arith.index_cast %arg1 : i32 to index
    %1 = memref.load %arg3[%0] : memref<4xi32, #tpu.memory_space<smem>>
    %c0_i32 = arith.constant 0 : i32
    return %1, %arg0 : i32, i32
  }
}

</mosaic_0001>

<llo_original>
// kernel: tpu_custom_call.1
$region0: #{tpu_custom_call.1}
  #allocation0 [shape = 'u32[]', space=smem, size = 0x4, offset = 0x4, fixed_abs, tag = 'smem constant byte address 0x4 - core index']
  #allocation1 [shape = 'u32[144,128]{1,0:T(1,128)}', space=vmem, size = 0x12000, scoped, tag = 'internal scratch']
  #allocation2 [shape = 's32[1]{0}', space=sflag, size = 0x4, scoped, tag = 'scoped memory for tpu_custom_call.1']
  #allocation3 [shape = 'u8[512]{0}', space=smem, size = 0x200, scoped, tag = 'prefetched SMEM operand 0']
  #allocation4 [shape = 'u8[512]{0}', space=smem, size = 0x200, scoped, tag = 'prefetched SMEM operand 1']
  #allocation5 [shape = 'u8[512]{0}', space=smem, size = 0x200, scoped, tag = 'prefetched SMEM operand 2']
  #allocation6 [shape = 'u8[512]{0}', space=smem, size = 0x200, scoped, tag = 'prefetched SMEM operand 3']
  %s0 = inlined_call_operand.hbm [shape: s32[4], index: 0, kind: input, shape index: {}]
  %s1 = inlined_call_operand.hbm [shape: s32[4], index: 1, kind: input, shape index: {}]
  %s2 = inlined_call_operand.hbm [shape: s32[4], index: 2, kind: input, shape index: {}]
  %s3 = inlined_call_operand.hbm [shape: s32[4], index: 3, kind: input, shape index: {}]
  %s4 = inlined_call_operand.hbm [shape: bf16[32,512], index: 4, kind: input, shape index: {}]
  %s5 = inlined_call_operand.hbm [shape: bf16[4,512,384], index: 5, kind: input, shape index: {}]
  %s6 = inlined_call_operand.hbm [shape: f32[4,1,384], index: 6, kind: input, shape index: {}]
  %s7 = inlined_call_operand.hbm [shape: f32[32,384], index: 7, kind: output, shape index: {}]
  %s8 = sld [smem:[#allocation0]]
  $region65: #{tpu_custom_call.1} parent=0
    _
  %s10 = ssub.s32 1, %s8
  %s11 = scalar_select 0, %s10, %s8
  %13 = dma.hbm_to_smem %s0, 16, [#allocation3], [#allocation2]
  %15 = dma.hbm_to_smem %s1, 16, [#allocation4], [#allocation2]
  %17 = dma.hbm_to_smem %s2, 16, [#allocation5], [#allocation2]
  %19 = dma.hbm_to_smem %s3, 16, [#allocation6], [#allocation2]
  %20 = dma.done [#allocation2], 64
  %21 = sfence
  $region1: #{tpu_custom_call.1} parent=0
    #allocation7 [shape = 'u8[32768]{0}', space=vmem, size = 0x8000, scoped, tag = 'input window, operand 4']
    #allocation8 [shape = 's32[2]{0}', space=sflag, size = 0x8, scoped, tag = 'scoped memory for tpu_custom_call.1']
    #allocation9 [shape = 's32[2]{0}', space=sflag, size = 0x8, scoped, tag = 'scoped memory for tpu_custom_call.1']
    #allocation10 [shape = 'u8[786432]{0}', space=vmem, size = 0xc0000, scoped, tag = 'input window, operand 5']
    #allocation11 [shape = 's32[2]{0}', space=sflag, size = 0x8, scoped, tag = 'scoped memory for tpu_custom_call.1']
    #allocation12 [shape = 'u8[3072]{0}', space=vmem, size = 0xc00, scoped, tag = 'input window, operand 6']
    #allocation13 [shape = 'u8[49152]{0}', space=vmem, size = 0xc000, scoped, tag = 'output window, operand 0']
    %22 = vsyncpa [#allocation8], 0
    %s23 = scalar_lea.sflag [#allocation8], 1
    %24 = vsyncpa %s23, 0
    %25 = vsyncpa [#allocation11], 0
    %s26 = scalar_lea.sflag [#allocation11], 1
    %27 = vsyncpa %s26, 0
    %28 = vsyncpa [#allocation9], 0
    %s29 = scalar_lea.sflag [#allocation9], 1
    %30 = vsyncpa %s29, 0
    loop: start=0, step=1, limit=6
    $region2: #{tpu_custom_call.1} parent=1 // loop_pre_header
      _
    $region3: #{tpu_custom_call.1} parent=1 // loop_header
      %s32 = sphi 0, %s36
      %p33 = scmp.ge.s32.totalorder %s32, 6
      %s39 = sphi 0, %s58
      %s40 = sphi 0, %s54
      %s41 = sphi 0, %s50
      %s42 = sphi 0, %s39
      %s43 = sphi 0, %s40
      %s44 = sphi 0, %s41
      %s45 = sphi 0, %s42
      %s46 = sphi 0, %s43
      %s47 = sphi 0, %s44
      %s65 = sphi 0, %s67
      %s68 = sphi 0, %s65
      %s69 = sphi 0, %s68
      %s85 = sphi 0, %s69
      %s97 = sphi 0, %s99
      %s100 = sphi 0, %s97
      %s101 = sphi 0, %s100
      %s117 = sphi 0, %s101
      %s127 = sphi 0, %s129
      %s130 = sphi 0, %s127
      %s131 = sphi 0, %s130
      %s147 = sphi 0, %s131
      %s157 = sphi 0, %s159
      %s160 = sphi 0, %s157
      %s161 = sphi 0, %s160
      %s177 = sphi 0, %s161
    $region4: #{tpu_custom_call.1} parent=1 // loop_header_branch
      %35 = sbr.rel (%p33) target = $region8
    $region5: #{tpu_custom_call.1} parent=1 // loop_body
      %s37 = ssub.s32 %s32, 1
      %s38 = ssub.s32 %s32, 2
      %s48 = sadd.s32 1, %s41
      %p49 = scmp.ge.s32.totalorder %s48, 1
      %s50 = scalar_select %p49, 0, %s48
      %s51 = sadd.s32 1, %s40
      %s52 = scalar_select %p49, %s51, %s40
      %p53 = scmp.ge.s32.totalorder %s52, 4
      %s54 = scalar_select %p53, 0, %s52
      %s55 = sadd.s32 1, %s39
      %s56 = scalar_select %p53, %s55, %s39
      %p57 = scmp.ge.s32.totalorder %s56, 1
      %s58 = scalar_select %p57, 0, %s56
      %s59 = sld [smem:[#allocation3 + %s40]]
      %s60 = sld [smem:[#allocation3 + %s54]]
      %s61 = ssub.s32 %s59, %s60
      %s62 = ssub.s32 %s41, %s50
      %s63 = sor.u32 %s61, %s62
      %p64 = scmp.eq.s32.totalorder %s63, 0
      %s66 = sadd.s32 %s65, 1
      %s67 = scalar_select %p64, %s65, %s66
      %p70 = pneg %p64
      %p71 = scmp.eq.s32.totalorder %s32, 3
      %p72 = por %p70, %p71
      %p73 = scmp.ne.s32.totalorder %s65, %s68
      %p74 = scmp.eq.s32.totalorder %s32, 0
      %p75 = por %p73, %p74
      %p76 = scmp.ne.s32.totalorder %s65, %s68
      %p77 = scmp.eq.s32.totalorder %s37, 3
      %p78 = por %p76, %p77
      %p79 = scmp.ne.s32.totalorder %s68, %s69
      %p80 = scmp.eq.s32.totalorder %s37, 0
      %p81 = por %p79, %p80
      %p82 = scmp.ne.s32.totalorder %s68, %s69
      %p83 = scmp.eq.s32.totalorder %s38, 3
      %p84 = por %p82, %p83
      %p86 = scmp.ne.s32.totalorder %s69, %s85
      %p87 = scmp.eq.s32.totalorder %s38, 0
      %p88 = por %p86, %p87
      %s89 = sld [smem:[#allocation4 + %s40]]
      %s90 = sld [smem:[#allocation4 + %s54]]
      %s91 = ssub.s32 %s89, %s90
      %s92 = ssub.s32 %s41, %s50
      %s93 = sor.u32 %s91, %s92
      %s94 = ssub.s32 %s39, %s58
      %s95 = sor.u32 %s93, %s94
      %p96 = scmp.eq.s32.totalorder %s95, 0
      %s98 = sadd.s32 %s97, 1
      %s99 = scalar_select %p96, %s97, %s98
      %p102 = pneg %p96
      %p103 = scmp.eq.s32.totalorder %s32, 3
      %p104 = por %p102, %p103
      %p105 = scmp.ne.s32.totalorder %s97, %s100
      %p106 = scmp.eq.s32.totalorder %s32, 0
      %p107 = por %p105, %p106
      %p108 = scmp.ne.s32.totalorder %s97, %s100
      %p109 = scmp.eq.s32.totalorder %s37, 3
      %p110 = por %p108, %p109
      %p111 = scmp.ne.s32.totalorder %s100, %s101
      %p112 = scmp.eq.s32.totalorder %s37, 0
      %p113 = por %p111, %p112
      %p114 = scmp.ne.s32.totalorder %s100, %s101
      %p115 = scmp.eq.s32.totalorder %s38, 3
      %p116 = por %p114, %p115
      %p118 = scmp.ne.s32.totalorder %s101, %s117
      %p119 = scmp.eq.s32.totalorder %s38, 0
      %p120 = por %p118, %p119
      %s121 = sld [smem:[#allocation4 + %s40]]
      %s122 = sld [smem:[#allocation4 + %s54]]
      %s123 = ssub.s32 %s121, %s122
      %s124 = ssub.s32 %s39, %s58
      %s125 = sor.u32 %s123, %s124
      %p126 = scmp.eq.s32.totalorder %s125, 0
      %s128 = sadd.s32 %s127, 1
      %s129 = scalar_select %p126, %s127, %s128
      %p132 = pneg %p126
      %p133 = scmp.eq.s32.totalorder %s32, 3
      %p134 = por %p132, %p133
      %p135 = scmp.ne.s32.totalorder %s127, %s130
      %p136 = scmp.eq.s32.totalorder %s32, 0
      %p137 = por %p135, %p136
      %p138 = scmp.ne.s32.totalorder %s127, %s130
      %p139 = scmp.eq.s32.totalorder %s37, 3
      %p140 = por %p138, %p139
      %p141 = scmp.ne.s32.totalorder %s130, %s131
      %p142 = scmp.eq.s32.totalorder %s37, 0
      %p143 = por %p141, %p142
      %p144 = scmp.ne.s32.totalorder %s130, %s131
      %p145 = scmp.eq.s32.totalorder %s38, 3
      %p146 = por %p144, %p145
      %p148 = scmp.ne.s32.totalorder %s131, %s147
      %p149 = scmp.eq.s32.totalorder %s38, 0
      %p150 = por %p148, %p149
      %s151 = sld [smem:[#allocation3 + %s40]]
      %s152 = sld [smem:[#allocation3 + %s54]]
      %s153 = ssub.s32 %s151, %s152
      %s154 = ssub.s32 %s39, %s58
      %s155 = sor.u32 %s153, %s154
      %p156 = scmp.eq.s32.totalorder %s155, 0
      %s158 = sadd.s32 %s157, 1
      %s159 = scalar_select %p156, %s157, %s158
      %p162 = pneg %p156
      %p163 = scmp.eq.s32.totalorder %s32, 3
      %p164 = por %p162, %p163
      %p165 = scmp.ne.s32.totalorder %s157, %s160
      %p166 = scmp.eq.s32.totalorder %s32, 0
      %p167 = por %p165, %p166
      %p168 = scmp.ne.s32.totalorder %s157, %s160
      %p169 = scmp.eq.s32.totalorder %s37, 3
      %p170 = por %p168, %p169
      %p171 = scmp.ne.s32.totalorder %s160, %s161
      %p172 = scmp.eq.s32.totalorder %s37, 0
      %p173 = por %p171, %p172
      %p174 = scmp.ne.s32.totalorder %s160, %s161
      %p175 = scmp.eq.s32.totalorder %s38, 3
      %p176 = por %p174, %p175
      %p178 = scmp.ne.s32.totalorder %s161, %s177
      %p179 = scmp.eq.s32.totalorder %s38, 0
      %p180 = por %p178, %p179
      %p181 = scmp.le.s32.totalorder 1, %s32
      %p182 = scmp.lt.s32.totalorder %s32, 5
      %p183 = pnand %p181, %p182
      %p184 = pneg %p183
      // Predicated region
      $region9: #{tpu_custom_call.1} parent=5 // pred_check
        _
      $region10: #{tpu_custom_call.1} parent=5 // pred_check_branch
        %186 = sbr.rel (%p183) target = $region12
      $region11: #{tpu_custom_call.1} parent=5 // pred_region
        %s187 = ssub.s32 %s32, 1
      $region12: #{tpu_custom_call.1} parent=5 // pred_fallthru
        _
      %p188 = scmp.lt.s32.totalorder %s32, 4
      // Predicated region
      $region13: #{tpu_custom_call.1} parent=5 // pred_check
        %p189 = pneg %p188
      $region14: #{tpu_custom_call.1} parent=5 // pred_check_branch
        %191 = sbr.rel (%p189) target = $region16
      $region15: #{tpu_custom_call.1} parent=5 // pred_region
        // Predicated region
        $region17: #{tpu_custom_call.1} parent=15 // pred_check
          %p192 = pneg %p75
        $region18: #{tpu_custom_call.1} parent=15 // pred_check_branch
          %194 = sbr.rel (%p192) target = $region20
        $region19: #{tpu_custom_call.1} parent=15 // pred_region
          %s195 = sand.u32 %s65, 1
          %s196 = scalar_lea.sflag [#allocation8], %s195
          %s197 = sand.u32 %s65, 1
          %s198 = smul.addr %s197, 32
          %s199 = scalar_lea.vmem [#allocation7], %s198
          %s200 = sld [smem:[#allocation3 + %s40]]
          %s201 = smul.u32 2, %s200
          %s202 = smul.u32 4, %s41
          %s204 = ssub.s32 512, 512
          %205 = vsyncadd %s196, %s204
          %s206 = smul.addr %s201, 4
          %s207 = sadd.s32 %s202, %s206
          %s208 = smul.addr %s207, 64
          %s209 = scalar_lea.hbm %s4, %s208
          %s210 = sshll.u32 %s199, 4
          %s211 = int_to_ptr.vmem [resolvable:$true] %s210
          %216 = dma.hbm_to_vmem [thread:$0]  %s209, 512, %s211, %s196, 256, 256, 16
        $region20: #{tpu_custom_call.1} parent=15 // pred_fallthru
          _
        // Predicated region
        $region21: #{tpu_custom_call.1} parent=15 // pred_check
          %p217 = pneg %p107
        $region22: #{tpu_custom_call.1} parent=15 // pred_check_branch
          %219 = sbr.rel (%p217) target = $region24
        $region23: #{tpu_custom_call.1} parent=15 // pred_region
          %s220 = sand.u32 %s32, 1
          %s221 = scalar_lea.sflag [#allocation11], %s220
          %s222 = sand.u32 %s97, 1
          %s223 = smul.addr %s222, 768
          %s224 = scalar_lea.vmem [#allocation10], %s223
          %s225 = sld [smem:[#allocation4 + %s40]]
          %s226 = smul.u32 64, %s41
          %s227 = smul.u32 3, %s39
          %s229 = ssub.s32 12288, 12288
          %230 = vsyncadd %s221, %s229
          %s231 = smul.addr %s226, 3
          %s232 = sadd.s32 %s227, %s231
          %s233 = smul.addr %s225, 192
          %s234 = sadd.s32 %s232, %s233
          %s235 = smul.addr %s234, 64
          %s236 = scalar_lea.hbm %s5, %s235
          %s237 = sshll.u32 %s224, 4
          %s238 = int_to_ptr.vmem [resolvable:$true] %s237
          %243 = dma.hbm_to_vmem [thread:$0]  %s236, 12288, %s238, %s221, 192, 192, 12
        $region24: #{tpu_custom_call.1} parent=15 // pred_fallthru
          _
        // Predicated region
        $region25: #{tpu_custom_call.1} parent=15 // pred_check
          %p244 = pneg %p137
        $region26: #{tpu_custom_call.1} parent=15 // pred_check_branch
          %246 = sbr.rel (%p244) target = $region28
        $region27: #{tpu_custom_call.1} parent=15 // pred_region
          %s247 = sand.u32 %s32, 1
          %s248 = scalar_lea.sflag [#allocation11], %s247
          %s249 = sand.u32 %s127, 1
          %s250 = smul.addr %s249, 3
          %s251 = scalar_lea.vmem [#allocation12], %s250
          %s252 = sld [smem:[#allocation4 + %s40]]
          %s253 = smul.u32 3, %s39
          %s255 = ssub.s32 48, 48
          %256 = vsyncadd %s248, %s255
          %s257 = smul.addr %s252, 3
          %s258 = sadd.s32 %s253, %s257
          %s259 = smul.addr %s258, 16
          %s260 = scalar_lea.hbm %s6, %s259
          %s262 = sshll.u32 %s251, 4
          %s263 = int_to_ptr.vmem [resolvable:$true] %s262
          %265 = dma.hbm_to_vmem [thread:$0]  %s260, 48, %s263, %s248
        $region28: #{tpu_custom_call.1} parent=15 // pred_fallthru
          _
      $region16: #{tpu_custom_call.1} parent=5 // pred_fallthru
        _
      %p266 = scmp.le.s32.totalorder 1, %s32
      %p267 = scmp.lt.s32.totalorder %s32, 5
      %p268 = pnand %p266, %p267
      %p269 = pneg %p268
      // Predicated region
      $region29: #{tpu_custom_call.1} parent=5 // pred_check
        _
      $region30: #{tpu_custom_call.1} parent=5 // pred_check_branch
        %271 = sbr.rel (%p268) target = $region32
      $region31: #{tpu_custom_call.1} parent=5 // pred_region
        %s272 = ssub.s32 %s32, 1
        %s273 = sand.u32 %s68, 1
        %s274 = scalar_lea.sflag [#allocation8], %s273
        %s275 = sand.u32 %s68, 1
        %s276 = smul.addr %s275, 32
        %s277 = scalar_lea.vmem [#allocation7], %s276
        // Predicated region
        $region33: #{tpu_custom_call.1} parent=31 // pred_check
          %p278 = pneg %p81
        $region34: #{tpu_custom_call.1} parent=31 // pred_check_branch
          %280 = sbr.rel (%p278) target = $region36
        $region35: #{tpu_custom_call.1} parent=31 // pred_region
          %281 = dma.done %s274, 512
        $region36: #{tpu_custom_call.1} parent=31 // pred_fallthru
          _
        %s282 = sand.u32 %s37, 1
        %s283 = scalar_lea.sflag [#allocation11], %s282
        %s284 = sand.u32 %s100, 1
        %s285 = smul.addr %s284, 768
        %s286 = scalar_lea.vmem [#allocation10], %s285
        // Predicated region
        $region37: #{tpu_custom_call.1} parent=31 // pred_check
          %p287 = pneg %p113
        $region38: #{tpu_custom_call.1} parent=31 // pred_check_branch
          %289 = sbr.rel (%p287) target = $region40
        $region39: #{tpu_custom_call.1} parent=31 // pred_region
          %290 = dma.done %s283, 12288
        $region40: #{tpu_custom_call.1} parent=31 // pred_fallthru
          _
        %s291 = sand.u32 %s37, 1
        %s292 = scalar_lea.sflag [#allocation11], %s291
        %s293 = sand.u32 %s130, 1
        %s294 = smul.addr %s293, 3
        %s295 = scalar_lea.vmem [#allocation12], %s294
        // Predicated region
        $region41: #{tpu_custom_call.1} parent=31 // pred_check
          %p296 = pneg %p143
        $region42: #{tpu_custom_call.1} parent=31 // pred_check_branch
          %298 = sbr.rel (%p296) target = $region44
        $region43: #{tpu_custom_call.1} parent=31 // pred_region
          %299 = dma.done %s292, 48
        $region44: #{tpu_custom_call.1} parent=31 // pred_fallthru
          _
        %s300 = sand.u32 %s68, 1
        %s301 = scalar_lea.sflag [#allocation8], %s300
        %s302 = sand.u32 %s68, 1
        %s303 = smul.addr %s302, 32
        %s304 = scalar_lea.vmem [#allocation7], %s303
        %p305 = pneg %p81
        %p306 = pneg %p78
        %s307 = sand.u32 %s37, 1
        %s308 = scalar_lea.sflag [#allocation11], %s307
        %s309 = sand.u32 %s100, 1
        %s310 = smul.addr %s309, 768
        %s311 = scalar_lea.vmem [#allocation10], %s310
        %p312 = pneg %p113
        %p313 = pneg %p110
        %s314 = sand.u32 %s37, 1
        %s315 = scalar_lea.sflag [#allocation11], %s314
        %s316 = sand.u32 %s130, 1
        %s317 = smul.addr %s316, 3
        %s318 = scalar_lea.vmem [#allocation12], %s317
        %p319 = pneg %p143
        %p320 = pneg %p140
        %p321 = pneg %p173
        %p322 = pneg %p170
        %s323 = sand.u32 %s160, 1
        %s324 = scalar_lea.sflag [#allocation9], %s323
        %s325 = sand.u32 %s160, 1
        %s326 = smul.addr %s325, 48
        %s327 = scalar_lea.vmem [#allocation13], %s326
        %s328 = sld [smem:[#allocation3 + %s43]]
        %s329 = smul.u32 2, %s328
        %s330 = smul.u32 4, %s44
        %s331 = sld [smem:[#allocation4 + %s43]]
        %s332 = smul.u32 64, %s44
        %s333 = smul.u32 3, %s42
        %s334 = sld [smem:[#allocation4 + %s43]]
        %s335 = smul.u32 3, %s42
        %s336 = sld [smem:[#allocation3 + %s43]]
        %s337 = smul.u32 2, %s336
        %s338 = smul.u32 3, %s42
        %s340 = sld [smem:[#allocation5 + %s43]]
        %s341 = sld [smem:[#allocation6 + %s43]]
        %v342 = vld [vmem:[%s277] sm:$0xff]
        %v343 = vld [vmem:[%s277 + $0x8] sm:$0xff]
        %v344 = vld [vmem:[%s277 + $0x10] sm:$0xff]
        %v345 = vld [vmem:[%s277 + $0x18] sm:$0xff]
        %v346 = vld [vmem:[%s286] sm:$0xff]
        %v347 = vld [vmem:[%s286 + $0x8] sm:$0xf]
        %v348 = vld [vmem:[%s286 + $0xc] sm:$0xff]
        %v349 = vld [vmem:[%s286 + $0x14] sm:$0xf]
        %v350 = vld [vmem:[%s286 + $0x18] sm:$0xff]
        %v351 = vld [vmem:[%s286 + $0x20] sm:$0xf]
        %v352 = vld [vmem:[%s286 + $0x24] sm:$0xff]
        %v353 = vld [vmem:[%s286 + $0x2c] sm:$0xf]
        %v354 = vld [vmem:[%s286 + $0x30] sm:$0xff]
        %v355 = vld [vmem:[%s286 + $0x38] sm:$0xf]
        %v356 = vld [vmem:[%s286 + $0x3c] sm:$0xff]
        %v357 = vld [vmem:[%s286 + $0x44] sm:$0xf]
        %v358 = vld [vmem:[%s286 + $0x48] sm:$0xff]
        %v359 = vld [vmem:[%s286 + $0x50] sm:$0xf]
        %v360 = vld [vmem:[%s286 + $0x54] sm:$0xff]
        %v361 = vld [vmem:[%s286 + $0x5c] sm:$0xf]
        %v362 = vld [vmem:[%s286 + $0x60] sm:$0xff]
        %v363 = vld [vmem:[%s286 + $0x68] sm:$0xf]
        %v364 = vld [vmem:[%s286 + $0x6c] sm:$0xff]
        %v365 = vld [vmem:[%s286 + $0x74] sm:$0xf]
        %v366 = vld [vmem:[%s286 + $0x78] sm:$0xff]
        %v367 = vld [vmem:[%s286 + $0x80] sm:$0xf]
        %v368 = vld [vmem:[%s286 + $0x84] sm:$0xff]
        %v369 = vld [vmem:[%s286 + $0x8c] sm:$0xf]
        %v370 = vld [vmem:[%s286 + $0x90] sm:$0xff]
        %v371 = vld [vmem:[%s286 + $0x98] sm:$0xf]
        %v372 = vld [vmem:[%s286 + $0x9c] sm:$0xff]
        %v373 = vld [vmem:[%s286 + $0xa4] sm:$0xf]
        %v374 = vld [vmem:[%s286 + $0xa8] sm:$0xff]
        %v375 = vld [vmem:[%s286 + $0xb0] sm:$0xf]
        %v376 = vld [vmem:[%s286 + $0xb4] sm:$0xff]
        %v377 = vld [vmem:[%s286 + $0xbc] sm:$0xf]
        %v378 = vld [vmem:[%s286 + $0xc0] sm:$0xff]
        %v379 = vld [vmem:[%s286 + $0xc8] sm:$0xf]
        %v380 = vld [vmem:[%s286 + $0xcc] sm:$0xff]
        %v381 = vld [vmem:[%s286 + $0xd4] sm:$0xf]
        %v382 = vld [vmem:[%s286 + $0xd8] sm:$0xff]
        %v383 = vld [vmem:[%s286 + $0xe0] sm:$0xf]
        %v384 = vld [vmem:[%s286 + $0xe4] sm:$0xff]
        %v385 = vld [vmem:[%s286 + $0xec] sm:$0xf]
        %v386 = vld [vmem:[%s286 + $0xf0] sm:$0xff]
        %v387 = vld [vmem:[%s286 + $0xf8] sm:$0xf]
        %v388 = vld [vmem:[%s286 + $0xfc] sm:$0xff]
        %v389 = vld [vmem:[%s286 + $0x104] sm:$0xf]
        %v390 = vld [vmem:[%s286 + $0x108] sm:$0xff]
        %v391 = vld [vmem:[%s286 + $0x110] sm:$0xf]
        %v392 = vld [vmem:[%s286 + $0x114] sm:$0xff]
        %v393 = vld [vmem:[%s286 + $0x11c] sm:$0xf]
        %v394 = vld [vmem:[%s286 + $0x120] sm:$0xff]
        %v395 = vld [vmem:[%s286 + $0x128] sm:$0xf]
        %v396 = vld [vmem:[%s286 + $0x12c] sm:$0xff]
        %v397 = vld [vmem:[%s286 + $0x134] sm:$0xf]
        %v398 = vld [vmem:[%s286 + $0x138] sm:$0xff]
        %v399 = vld [vmem:[%s286 + $0x140] sm:$0xf]
        %v400 = vld [vmem:[%s286 + $0x144] sm:$0xff]
        %v401 = vld [vmem:[%s286 + $0x14c] sm:$0xf]
        %v402 = vld [vmem:[%s286 + $0x150] sm:$0xff]
        %v403 = vld [vmem:[%s286 + $0x158] sm:$0xf]
        %v404 = vld [vmem:[%s286 + $0x15c] sm:$0xff]
        %v405 = vld [vmem:[%s286 + $0x164] sm:$0xf]
        %v406 = vld [vmem:[%s286 + $0x168] sm:$0xff]
        %v407 = vld [vmem:[%s286 + $0x170] sm:$0xf]
        %v408 = vld [vmem:[%s286 + $0x174] sm:$0xff]
        %v409 = vld [vmem:[%s286 + $0x17c] sm:$0xf]
        %v410 = vld [vmem:[%s286 + $0x180] sm:$0xff]
        %v411 = vld [vmem:[%s286 + $0x188] sm:$0xf]
        %v412 = vld [vmem:[%s286 + $0x18c] sm:$0xff]
        %v413 = vld [vmem:[%s286 + $0x194] sm:$0xf]
        %v414 = vld [vmem:[%s286 + $0x198] sm:$0xff]
        %v415 = vld [vmem:[%s286 + $0x1a0] sm:$0xf]
        %v416 = vld [vmem:[%s286 + $0x1a4] sm:$0xff]
        %v417 = vld [vmem:[%s286 + $0x1ac] sm:$0xf]
        %v418 = vld [vmem:[%s286 + $0x1b0] sm:$0xff]
        %v419 = vld [vmem:[%s286 + $0x1b8] sm:$0xf]
        %v420 = vld [vmem:[%s286 + $0x1bc] sm:$0xff]
        %v421 = vld [vmem:[%s286 + $0x1c4] sm:$0xf]
        %v422 = vld [vmem:[%s286 + $0x1c8] sm:$0xff]
        %v423 = vld [vmem:[%s286 + $0x1d0] sm:$0xf]
        %v424 = vld [vmem:[%s286 + $0x1d4] sm:$0xff]
        %v425 = vld [vmem:[%s286 + $0x1dc] sm:$0xf]
        %v426 = vld [vmem:[%s286 + $0x1e0] sm:$0xff]
        %v427 = vld [vmem:[%s286 + $0x1e8] sm:$0xf]
        %v428 = vld [vmem:[%s286 + $0x1ec] sm:$0xff]
        %v429 = vld [vmem:[%s286 + $0x1f4] sm:$0xf]
        %v430 = vld [vmem:[%s286 + $0x1f8] sm:$0xff]
        %v431 = vld [vmem:[%s286 + $0x200] sm:$0xf]
        %v432 = vld [vmem:[%s286 + $0x204] sm:$0xff]
        %v433 = vld [vmem:[%s286 + $0x20c] sm:$0xf]
        %v434 = vld [vmem:[%s286 + $0x210] sm:$0xff]
        %v435 = vld [vmem:[%s286 + $0x218] sm:$0xf]
        %v436 = vld [vmem:[%s286 + $0x21c] sm:$0xff]
        %v437 = vld [vmem:[%s286 + $0x224] sm:$0xf]
        %v438 = vld [vmem:[%s286 + $0x228] sm:$0xff]
        %v439 = vld [vmem:[%s286 + $0x230] sm:$0xf]
        %v440 = vld [vmem:[%s286 + $0x234] sm:$0xff]
        %v441 = vld [vmem:[%s286 + $0x23c] sm:$0xf]
        %v442 = vld [vmem:[%s286 + $0x240] sm:$0xff]
        %v443 = vld [vmem:[%s286 + $0x248] sm:$0xf]
        %v444 = vld [vmem:[%s286 + $0x24c] sm:$0xff]
        %v445 = vld [vmem:[%s286 + $0x254] sm:$0xf]
        %v446 = vld [vmem:[%s286 + $0x258] sm:$0xff]
        %v447 = vld [vmem:[%s286 + $0x260] sm:$0xf]
        %v448 = vld [vmem:[%s286 + $0x264] sm:$0xff]
        %v449 = vld [vmem:[%s286 + $0x26c] sm:$0xf]
        %v450 = vld [vmem:[%s286 + $0x270] sm:$0xff]
        %v451 = vld [vmem:[%s286 + $0x278] sm:$0xf]
        %v452 = vld [vmem:[%s286 + $0x27c] sm:$0xff]
        %v453 = vld [vmem:[%s286 + $0x284] sm:$0xf]
        %v454 = vld [vmem:[%s286 + $0x288] sm:$0xff]
        %v455 = vld [vmem:[%s286 + $0x290] sm:$0xf]
        %v456 = vld [vmem:[%s286 + $0x294] sm:$0xff]
        %v457 = vld [vmem:[%s286 + $0x29c] sm:$0xf]
        %v458 = vld [vmem:[%s286 + $0x2a0] sm:$0xff]
        %v459 = vld [vmem:[%s286 + $0x2a8] sm:$0xf]
        %v460 = vld [vmem:[%s286 + $0x2ac] sm:$0xff]
        %v461 = vld [vmem:[%s286 + $0x2b4] sm:$0xf]
        %v462 = vld [vmem:[%s286 + $0x2b8] sm:$0xff]
        %v463 = vld [vmem:[%s286 + $0x2c0] sm:$0xf]
        %v464 = vld [vmem:[%s286 + $0x2c4] sm:$0xff]
        %v465 = vld [vmem:[%s286 + $0x2cc] sm:$0xf]
        %v466 = vld [vmem:[%s286 + $0x2d0] sm:$0xff]
        %v467 = vld [vmem:[%s286 + $0x2d8] sm:$0xf]
        %v468 = vld [vmem:[%s286 + $0x2dc] sm:$0xff]
        %v469 = vld [vmem:[%s286 + $0x2e4] sm:$0xf]
        %v470 = vld [vmem:[%s286 + $0x2e8] sm:$0xff]
        %v471 = vld [vmem:[%s286 + $0x2f0] sm:$0xf]
        %v472 = vld [vmem:[%s286 + $0x2f4] sm:$0xff]
        %v473 = vld [vmem:[%s286 + $0x2fc] sm:$0xf]
        %v474 = vld [vmem:[%s295] sm:$0x7]
        %v476 = vlaneseq
        %v477 = vshrl.u32 %v476, 7
        %v478 = vsub.s32 0, %v477
        %v479 = vrot.slane %v474, %v478
        %v480 = vlaneseq
        %v481 = vshrl.u32 %v480, 7
        %v482 = vsub.s32 1, %v481
        %v483 = vrot.slane %v474, %v482
        %v484 = vlaneseq
        %v485 = vshrl.u32 %v484, 7
        %v486 = vsub.s32 2, %v485
        %v487 = vrot.slane %v474, %v486
        %v495 = vunpack.c.l.b16 %v342
        %v496 = vunpack.c.h.b16 %v342
        %v497 = vunpack.c.l.b16 %v343
        %v498 = vunpack.c.h.b16 %v343
        %v499 = vunpack.c.l.b16 %v344
        %v500 = vunpack.c.h.b16 %v344
        %v501 = vunpack.c.l.b16 %v345
        %v502 = vunpack.c.h.b16 %v345
        %v503 = vpack.c.b16 %v499, %v495
        %v504 = vpack.c.b16 %v500, %v496
        %v505 = vpack.c.b16 %v501, %v497
        %v506 = vpack.c.b16 %v502, %v498
        %v639 = vunpack.c.l.b16 %v346
        %v640 = vunpack.c.h.b16 %v346
        %v641 = vunpack.c.l.b16 %v347
        %v642 = vunpack.c.l.b16 %v348
        %v643 = vunpack.c.h.b16 %v348
        %v644 = vunpack.c.l.b16 %v349
        %v645 = vunpack.c.l.b16 %v350
        %v646 = vunpack.c.h.b16 %v350
        %v647 = vunpack.c.l.b16 %v351
        %v648 = vunpack.c.l.b16 %v352
        %v649 = vunpack.c.h.b16 %v352
        %v650 = vunpack.c.l.b16 %v353
        %v651 = vunpack.c.l.b16 %v354
        %v652 = vunpack.c.h.b16 %v354
        %v653 = vunpack.c.l.b16 %v355
        %v654 = vunpack.c.l.b16 %v356
        %v655 = vunpack.c.h.b16 %v356
        %v656 = vunpack.c.l.b16 %v357
        %v657 = vunpack.c.l.b16 %v358
        %v658 = vunpack.c.h.b16 %v358
        %v659 = vunpack.c.l.b16 %v359
        %v660 = vunpack.c.l.b16 %v360
        %v661 = vunpack.c.h.b16 %v360
        %v662 = vunpack.c.l.b16 %v361
        %v663 = vunpack.c.l.b16 %v362
        %v664 = vunpack.c.h.b16 %v362
        %v665 = vunpack.c.l.b16 %v363
        %v666 = vunpack.c.l.b16 %v364
        %v667 = vunpack.c.h.b16 %v364
        %v668 = vunpack.c.l.b16 %v365
        %v669 = vunpack.c.l.b16 %v366
        %v670 = vunpack.c.h.b16 %v366
        %v671 = vunpack.c.l.b16 %v367
        %v672 = vunpack.c.l.b16 %v368
        %v673 = vunpack.c.h.b16 %v368
        %v674 = vunpack.c.l.b16 %v369
        %v675 = vunpack.c.l.b16 %v370
        %v676 = vunpack.c.h.b16 %v370
        %v677 = vunpack.c.l.b16 %v371
        %v678 = vunpack.c.l.b16 %v372
        %v679 = vunpack.c.h.b16 %v372
        %v680 = vunpack.c.l.b16 %v373
        %v681 = vunpack.c.l.b16 %v374
        %v682 = vunpack.c.h.b16 %v374
        %v683 = vunpack.c.l.b16 %v375
        %v684 = vunpack.c.l.b16 %v376
        %v685 = vunpack.c.h.b16 %v376
        %v686 = vunpack.c.l.b16 %v377
        %v687 = vunpack.c.l.b16 %v378
        %v688 = vunpack.c.h.b16 %v378
        %v689 = vunpack.c.l.b16 %v379
        %v690 = vunpack.c.l.b16 %v380
        %v691 = vunpack.c.h.b16 %v380
        %v692 = vunpack.c.l.b16 %v381
        %v693 = vunpack.c.l.b16 %v382
        %v694 = vunpack.c.h.b16 %v382
        %v695 = vunpack.c.l.b16 %v383
        %v696 = vunpack.c.l.b16 %v384
        %v697 = vunpack.c.h.b16 %v384
        %v698 = vunpack.c.l.b16 %v385
        %v699 = vunpack.c.l.b16 %v386
        %v700 = vunpack.c.h.b16 %v386
        %v701 = vunpack.c.l.b16 %v387
        %v702 = vunpack.c.l.b16 %v388
        %v703 = vunpack.c.h.b16 %v388
        %v704 = vunpack.c.l.b16 %v389
        %v705 = vunpack.c.l.b16 %v390
        %v706 = vunpack.c.h.b16 %v390
        %v707 = vunpack.c.l.b16 %v391
        %v708 = vunpack.c.l.b16 %v392
        %v709 = vunpack.c.h.b16 %v392
        %v710 = vunpack.c.l.b16 %v393
        %v711 = vunpack.c.l.b16 %v394
        %v712 = vunpack.c.h.b16 %v394
        %v713 = vunpack.c.l.b16 %v395
        %v714 = vunpack.c.l.b16 %v396
        %v715 = vunpack.c.h.b16 %v396
        %v716 = vunpack.c.l.b16 %v397
        %v717 = vunpack.c.l.b16 %v398
        %v718 = vunpack.c.h.b16 %v398
        %v719 = vunpack.c.l.b16 %v399
        %v720 = vunpack.c.l.b16 %v400
        %v721 = vunpack.c.h.b16 %v400
        %v722 = vunpack.c.l.b16 %v401
        %v723 = vunpack.c.l.b16 %v402
        %v724 = vunpack.c.h.b16 %v402
        %v725 = vunpack.c.l.b16 %v403
        %v726 = vunpack.c.l.b16 %v404
        %v727 = vunpack.c.h.b16 %v404
        %v728 = vunpack.c.l.b16 %v405
        %v729 = vunpack.c.l.b16 %v406
        %v730 = vunpack.c.h.b16 %v406
        %v731 = vunpack.c.l.b16 %v407
        %v732 = vunpack.c.l.b16 %v408
        %v733 = vunpack.c.h.b16 %v408
        %v734 = vunpack.c.l.b16 %v409
        %v735 = vunpack.c.l.b16 %v410
        %v736 = vunpack.c.h.b16 %v410
        %v737 = vunpack.c.l.b16 %v411
        %v738 = vunpack.c.l.b16 %v412
        %v739 = vunpack.c.h.b16 %v412
        %v740 = vunpack.c.l.b16 %v413
        %v741 = vunpack.c.l.b16 %v414
        %v742 = vunpack.c.h.b16 %v414
        %v743 = vunpack.c.l.b16 %v415
        %v744 = vunpack.c.l.b16 %v416
        %v745 = vunpack.c.h.b16 %v416
        %v746 = vunpack.c.l.b16 %v417
        %v747 = vunpack.c.l.b16 %v418
        %v748 = vunpack.c.h.b16 %v418
        %v749 = vunpack.c.l.b16 %v419
        %v750 = vunpack.c.l.b16 %v420
        %v751 = vunpack.c.h.b16 %v420
        %v752 = vunpack.c.l.b16 %v421
        %v753 = vunpack.c.l.b16 %v422
        %v754 = vunpack.c.h.b16 %v422
        %v755 = vunpack.c.l.b16 %v423
        %v756 = vunpack.c.l.b16 %v424
        %v757 = vunpack.c.h.b16 %v424
        %v758 = vunpack.c.l.b16 %v425
        %v759 = vunpack.c.l.b16 %v426
        %v760 = vunpack.c.h.b16 %v426
        %v761 = vunpack.c.l.b16 %v427
        %v762 = vunpack.c.l.b16 %v428
        %v763 = vunpack.c.h.b16 %v428
        %v764 = vunpack.c.l.b16 %v429
        %v765 = vunpack.c.l.b16 %v430
        %v766 = vunpack.c.h.b16 %v430
        %v767 = vunpack.c.l.b16 %v431
        %v768 = vunpack.c.l.b16 %v432
        %v769 = vunpack.c.h.b16 %v432
        %v770 = vunpack.c.l.b16 %v433
        %v771 = vunpack.c.l.b16 %v434
        %v772 = vunpack.c.h.b16 %v434
        %v773 = vunpack.c.l.b16 %v435
        %v774 = vunpack.c.l.b16 %v436
        %v775 = vunpack.c.h.b16 %v436
        %v776 = vunpack.c.l.b16 %v437
        %v777 = vunpack.c.l.b16 %v438
        %v778 = vunpack.c.h.b16 %v438
        %v779 = vunpack.c.l.b16 %v439
        %v780 = vunpack.c.l.b16 %v440
        %v781 = vunpack.c.h.b16 %v440
        %v782 = vunpack.c.l.b16 %v441
        %v783 = vunpack.c.l.b16 %v442
        %v784 = vunpack.c.h.b16 %v442
        %v785 = vunpack.c.l.b16 %v443
        %v786 = vunpack.c.l.b16 %v444
        %v787 = vunpack.c.h.b16 %v444
        %v788 = vunpack.c.l.b16 %v445
        %v789 = vunpack.c.l.b16 %v446
        %v790 = vunpack.c.h.b16 %v446
        %v791 = vunpack.c.l.b16 %v447
        %v792 = vunpack.c.l.b16 %v448
        %v793 = vunpack.c.h.b16 %v448
        %v794 = vunpack.c.l.b16 %v449
        %v795 = vunpack.c.l.b16 %v450
        %v796 = vunpack.c.h.b16 %v450
        %v797 = vunpack.c.l.b16 %v451
        %v798 = vunpack.c.l.b16 %v452
        %v799 = vunpack.c.h.b16 %v452
        %v800 = vunpack.c.l.b16 %v453
        %v801 = vunpack.c.l.b16 %v454
        %v802 = vunpack.c.h.b16 %v454
        %v803 = vunpack.c.l.b16 %v455
        %v804 = vunpack.c.l.b16 %v456
        %v805 = vunpack.c.h.b16 %v456
        %v806 = vunpack.c.l.b16 %v457
        %v807 = vunpack.c.l.b16 %v458
        %v808 = vunpack.c.h.b16 %v458
        %v809 = vunpack.c.l.b16 %v459
        %v810 = vunpack.c.l.b16 %v460
        %v811 = vunpack.c.h.b16 %v460
        %v812 = vunpack.c.l.b16 %v461
        %v813 = vunpack.c.l.b16 %v462
        %v814 = vunpack.c.h.b16 %v462
        %v815 = vunpack.c.l.b16 %v463
        %v816 = vunpack.c.l.b16 %v464
        %v817 = vunpack.c.h.b16 %v464
        %v818 = vunpack.c.l.b16 %v465
        %v819 = vunpack.c.l.b16 %v466
        %v820 = vunpack.c.h.b16 %v466
        %v821 = vunpack.c.l.b16 %v467
        %v822 = vunpack.c.l.b16 %v468
        %v823 = vunpack.c.h.b16 %v468
        %v824 = vunpack.c.l.b16 %v469
        %v825 = vunpack.c.l.b16 %v470
        %v826 = vunpack.c.h.b16 %v470
        %v827 = vunpack.c.l.b16 %v471
        %v828 = vunpack.c.l.b16 %v472
        %v829 = vunpack.c.h.b16 %v472
        %v830 = vunpack.c.l.b16 %v473
        %v831 = vpack.c.b16 %v642, %v639
        %v832 = vpack.c.b16 %v643, %v640
        %v833 = vpack.c.b16 %v644, %v641
        %v834 = vpack.c.b16 %v648, %v645
        %v835 = vpack.c.b16 %v649, %v646
        %v836 = vpack.c.b16 %v650, %v647
        %v837 = vpack.c.b16 %v654, %v651
        %v838 = vpack.c.b16 %v655, %v652
        %v839 = vpack.c.b16 %v656, %v653
        %v840 = vpack.c.b16 %v660, %v657
        %v841 = vpack.c.b16 %v661, %v658
        %v842 = vpack.c.b16 %v662, %v659
        %v843 = vpack.c.b16 %v666, %v663
        %v844 = vpack.c.b16 %v667, %v664
        %v845 = vpack.c.b16 %v668, %v665
        %v846 = vpack.c.b16 %v672, %v669
        %v847 = vpack.c.b16 %v673, %v670
        %v848 = vpack.c.b16 %v674, %v671
        %v849 = vpack.c.b16 %v678, %v675
        %v850 = vpack.c.b16 %v679, %v676
        %v851 = vpack.c.b16 %v680, %v677
        %v852 = vpack.c.b16 %v684, %v681
        %v853 = vpack.c.b16 %v685, %v682
        %v854 = vpack.c.b16 %v686, %v683
        %v855 = vpack.c.b16 %v690, %v687
        %v856 = vpack.c.b16 %v691, %v688
        %v857 = vpack.c.b16 %v692, %v689
        %v858 = vpack.c.b16 %v696, %v693
        %v859 = vpack.c.b16 %v697, %v694
        %v860 = vpack.c.b16 %v698, %v695
        %v861 = vpack.c.b16 %v702, %v699
        %v862 = vpack.c.b16 %v703, %v700
        %v863 = vpack.c.b16 %v704, %v701
        %v864 = vpack.c.b16 %v708, %v705
        %v865 = vpack.c.b16 %v709, %v706
        %v866 = vpack.c.b16 %v710, %v707
        %v867 = vpack.c.b16 %v714, %v711
        %v868 = vpack.c.b16 %v715, %v712
        %v869 = vpack.c.b16 %v716, %v713
        %v870 = vpack.c.b16 %v720, %v717
        %v871 = vpack.c.b16 %v721, %v718
        %v872 = vpack.c.b16 %v722, %v719
        %v873 = vpack.c.b16 %v726, %v723
        %v874 = vpack.c.b16 %v727, %v724
        %v875 = vpack.c.b16 %v728, %v725
        %v876 = vpack.c.b16 %v732, %v729
        %v877 = vpack.c.b16 %v733, %v730
        %v878 = vpack.c.b16 %v734, %v731
        %v879 = vpack.c.b16 %v738, %v735
        %v880 = vpack.c.b16 %v739, %v736
        %v881 = vpack.c.b16 %v740, %v737
        %v882 = vpack.c.b16 %v744, %v741
        %v883 = vpack.c.b16 %v745, %v742
        %v884 = vpack.c.b16 %v746, %v743
        %v885 = vpack.c.b16 %v750, %v747
        %v886 = vpack.c.b16 %v751, %v748
        %v887 = vpack.c.b16 %v752, %v749
        %v888 = vpack.c.b16 %v756, %v753
        %v889 = vpack.c.b16 %v757, %v754
        %v890 = vpack.c.b16 %v758, %v755
        %v891 = vpack.c.b16 %v762, %v759
        %v892 = vpack.c.b16 %v763, %v760
        %v893 = vpack.c.b16 %v764, %v761
        %v894 = vpack.c.b16 %v768, %v765
        %v895 = vpack.c.b16 %v769, %v766
        %v896 = vpack.c.b16 %v770, %v767
        %v897 = vpack.c.b16 %v774, %v771
        %v898 = vpack.c.b16 %v775, %v772
        %v899 = vpack.c.b16 %v776, %v773
        %v900 = vpack.c.b16 %v780, %v777
        %v901 = vpack.c.b16 %v781, %v778
        %v902 = vpack.c.b16 %v782, %v779
        %v903 = vpack.c.b16 %v786, %v783
        %v904 = vpack.c.b16 %v787, %v784
        %v905 = vpack.c.b16 %v788, %v785
        %v906 = vpack.c.b16 %v792, %v789
        %v907 = vpack.c.b16 %v793, %v790
        %v908 = vpack.c.b16 %v794, %v791
        %v909 = vpack.c.b16 %v798, %v795
        %v910 = vpack.c.b16 %v799, %v796
        %v911 = vpack.c.b16 %v800, %v797
        %v912 = vpack.c.b16 %v804, %v801
        %v913 = vpack.c.b16 %v805, %v802
        %v914 = vpack.c.b16 %v806, %v803
        %v915 = vpack.c.b16 %v810, %v807
        %v916 = vpack.c.b16 %v811, %v808
        %v917 = vpack.c.b16 %v812, %v809
        %v918 = vpack.c.b16 %v816, %v813
        %v919 = vpack.c.b16 %v817, %v814
        %v920 = vpack.c.b16 %v818, %v815
        %v921 = vpack.c.b16 %v822, %v819
        %v922 = vpack.c.b16 %v823, %v820
        %v923 = vpack.c.b16 %v824, %v821
        %v924 = vpack.c.b16 %v828, %v825
        %v925 = vpack.c.b16 %v829, %v826
        %v926 = vpack.c.b16 %v830, %v827
        %1023 = vmatprep.subr.bf16.mxu0 %v853
        %1024 = vmatpush1.bf16.msra.mxu0 %v852
        %1025 = vmatprep.subr.bf16.mxu0 %v850
        %1026 = vmatpush1.bf16.msra.mxu0 %v849
        %1027 = vmatprep.subr.bf16.mxu0 %v847
        %1028 = vmatpush1.bf16.msra.mxu0 %v846
        %1029 = vmatprep.subr.bf16.mxu0 %v844
        %1030 = vmatpush1.bf16.msra.mxu0 %v843
        %1031 = vmatprep.subr.bf16.mxu0 %v841
        %1032 = vmatpush1.bf16.msra.mxu0 %v840
        %1033 = vmatprep.subr.bf16.mxu0 %v838
        %1034 = vmatpush1.bf16.msra.mxu0 %v837
        %1035 = vmatprep.subr.bf16.mxu0 %v835
        %1036 = vmatpush1.bf16.msra.mxu0 %v834
        %1037 = vmatprep.subr.bf16.mxu0 %v832
        %1038 = vmatpush1.bf16.msra.mxu0 %v831
        %1039 = vmatprep.subr.bf16.mxu0 %v877
        %1040 = vmatpush2.bf16.msra.mxu0 %v876
        %1041 = vmatprep.subr.bf16.mxu0 %v874
        %1042 = vmatpush2.bf16.msra.mxu0 %v873
        %1043 = vmatprep.subr.bf16.mxu0 %v871
        %1044 = vmatpush2.bf16.msra.mxu0 %v870
        %1045 = vmatprep.subr.bf16.mxu0 %v868
        %1046 = vmatpush2.bf16.msra.mxu0 %v867
        %1047 = vmatprep.subr.bf16.mxu0 %v865
        %1048 = vmatpush2.bf16.msra.mxu0 %v864
        %1049 = vmatprep.subr.bf16.mxu0 %v862
        %1050 = vmatpush2.bf16.msra.mxu0 %v861
        %1051 = vmatprep.subr.bf16.mxu0 %v859
        %1052 = vmatpush2.bf16.msra.mxu0 %v858
        %1053 = vmatprep.subr.bf16.mxu0 %v856
        %1054 = vmatpush2.bf16.msra.mxu0 %v855
        %1055 = vmatprep.mubr.bf16.mxu0 %v504
        %1056 = vmatmul.mubr.bf16.gmra.mxu0 %v503
        %v1057 = vpop.f32.mrf.mxu0
        %v1058 = vadd.f32 %v479, %v1057
        %v1059 = vpop.f32.mrf.mxu0
        %v1060 = vadd.f32 %v483, %v1059
        %v1061 = vpop.f32.mrf.mxu0
        %v1062 = vadd.f32 %v479, %v1061
        %v1063 = vpop.f32.mrf.mxu0
        %v1064 = vadd.f32 %v483, %v1063
        %1065 = vdwg.mxu0
        %1066 = vmatprep.subr.bf16.mxu0 %v901
        %1067 = vmatpush1.bf16.msra.mxu0 %v900
        %1068 = vmatprep.subr.bf16.mxu0 %v898
        %1069 = vmatpush1.bf16.msra.mxu0 %v897
        %1070 = vmatprep.subr.bf16.mxu0 %v895
        %1071 = vmatpush1.bf16.msra.mxu0 %v894
        %1072 = vmatprep.subr.bf16.mxu0 %v892
        %1073 = vmatpush1.bf16.msra.mxu0 %v891
        %1074 = vmatprep.subr.bf16.mxu0 %v889
        %1075 = vmatpush1.bf16.msra.mxu0 %v888
        %1076 = vmatprep.subr.bf16.mxu0 %v886
        %1077 = vmatpush1.bf16.msra.mxu0 %v885
        %1078 = vmatprep.subr.bf16.mxu0 %v883
        %1079 = vmatpush1.bf16.msra.mxu0 %v882
        %1080 = vmatprep.subr.bf16.mxu0 %v880
        %1081 = vmatpush1.bf16.msra.mxu0 %v879
        %1082 = vmatprep.subr.bf16.mxu0 %v925
        %1083 = vmatpush2.bf16.msra.mxu0 %v924
        %1084 = vmatprep.subr.bf16.mxu0 %v922
        %1085 = vmatpush2.bf16.msra.mxu0 %v921
        %1086 = vmatprep.subr.bf16.mxu0 %v919
        %1087 = vmatpush2.bf16.msra.mxu0 %v918
        %1088 = vmatprep.subr.bf16.mxu0 %v916
        %1089 = vmatpush2.bf16.msra.mxu0 %v915
        %1090 = vmatprep.subr.bf16.mxu0 %v913
        %1091 = vmatpush2.bf16.msra.mxu0 %v912
        %1092 = vmatprep.subr.bf16.mxu0 %v910
        %1093 = vmatpush2.bf16.msra.mxu0 %v909
        %1094 = vmatprep.subr.bf16.mxu0 %v907
        %1095 = vmatpush2.bf16.msra.mxu0 %v906
        %1096 = vmatprep.subr.bf16.mxu0 %v904
        %1097 = vmatpush2.bf16.msra.mxu0 %v903
        %1098 = vmatprep.mubr.bf16.mxu0 %v506
        %1099 = vmatmul.mubr.bf16.gmra.mxu0 %v505
        %v1100 = vpop.f32.mrf.mxu0
        %v1101 = vadd.f32 %v1058, %v1100
        %v1102 = vpop.f32.mrf.mxu0
        %v1103 = vadd.f32 %v1060, %v1102
        %v1104 = vpop.f32.mrf.mxu0
        %v1105 = vadd.f32 %v1062, %v1104
        %v1106 = vpop.f32.mrf.mxu0
        %v1107 = vadd.f32 %v1064, %v1106
        %1108 = vdwg.mxu0
        %1109 = vmatprep.subr.bf16.mxu0 0
        %1110 = vmatpush1.bf16.msra.mxu0 %v854
        %1111 = vmatprep.subr.bf16.mxu0 0
        %1112 = vmatpush1.bf16.msra.mxu0 %v851
        %1113 = vmatprep.subr.bf16.mxu0 0
        %1114 = vmatpush1.bf16.msra.mxu0 %v848
        %1115 = vmatprep.subr.bf16.mxu0 0
        %1116 = vmatpush1.bf16.msra.mxu0 %v845
        %1117 = vmatprep.subr.bf16.mxu0 0
        %1118 = vmatpush1.bf16.msra.mxu0 %v842
        %1119 = vmatprep.subr.bf16.mxu0 0
        %1120 = vmatpush1.bf16.msra.mxu0 %v839
        %1121 = vmatprep.subr.bf16.mxu0 0
        %1122 = vmatpush1.bf16.msra.mxu0 %v836
        %1123 = vmatprep.subr.bf16.mxu0 0
        %1124 = vmatpush1.bf16.msra.mxu0 %v833
        %1125 = vmatprep.subr.bf16.mxu0 0
        %1126 = vmatpush2.bf16.msra.mxu0 %v878
        %1127 = vmatprep.subr.bf16.mxu0 0
        %1128 = vmatpush2.bf16.msra.mxu0 %v875
        %1129 = vmatprep.subr.bf16.mxu0 0
        %1130 = vmatpush2.bf16.msra.mxu0 %v872
        %1131 = vmatprep.subr.bf16.mxu0 0
        %1132 = vmatpush2.bf16.msra.mxu0 %v869
        %1133 = vmatprep.subr.bf16.mxu0 0
        %1134 = vmatpush2.bf16.msra.mxu0 %v866
        %1135 = vmatprep.subr.bf16.mxu0 0
        %1136 = vmatpush2.bf16.msra.mxu0 %v863
        %1137 = vmatprep.subr.bf16.mxu0 0
        %1138 = vmatpush2.bf16.msra.mxu0 %v860
        %1139 = vmatprep.subr.bf16.mxu0 0
        %1140 = vmatpush2.bf16.msra.mxu0 %v857
        %1141 = vmatprep.mubr.bf16.mxu0 %v504
        %1142 = vmatmul.mubr.bf16.gmra.mxu0 %v503
        %v1143 = vpop.f32.mrf.mxu0
        %v1144 = vadd.f32 %v487, %v1143
        %v1145 = vpop.f32.mrf.mxu0
        %v1146 = vpop.f32.mrf.mxu0
        %v1147 = vadd.f32 %v487, %v1146
        %v1148 = vpop.f32.mrf.mxu0
        %1149 = vdwg.mxu0
        %1150 = vmatprep.subr.bf16.mxu0 0
        %1151 = vmatpush1.bf16.msra.mxu0 %v902
        %1152 = vmatprep.subr.bf16.mxu0 0
        %1153 = vmatpush1.bf16.msra.mxu0 %v899
        %1154 = vmatprep.subr.bf16.mxu0 0
        %1155 = vmatpush1.bf16.msra.mxu0 %v896
        %1156 = vmatprep.subr.bf16.mxu0 0
        %1157 = vmatpush1.bf16.msra.mxu0 %v893
        %1158 = vmatprep.subr.bf16.mxu0 0
        %1159 = vmatpush1.bf16.msra.mxu0 %v890
        %1160 = vmatprep.subr.bf16.mxu0 0
        %1161 = vmatpush1.bf16.msra.mxu0 %v887
        %1162 = vmatprep.subr.bf16.mxu0 0
        %1163 = vmatpush1.bf16.msra.mxu0 %v884
        %1164 = vmatprep.subr.bf16.mxu0 0
        %1165 = vmatpush1.bf16.msra.mxu0 %v881
        %1166 = vmatprep.subr.bf16.mxu0 0
        %1167 = vmatpush2.bf16.msra.mxu0 %v926
        %1168 = vmatprep.subr.bf16.mxu0 0
        %1169 = vmatpush2.bf16.msra.mxu0 %v923
        %1170 = vmatprep.subr.bf16.mxu0 0
        %1171 = vmatpush2.bf16.msra.mxu0 %v920
        %1172 = vmatprep.subr.bf16.mxu0 0
        %1173 = vmatpush2.bf16.msra.mxu0 %v917
        %1174 = vmatprep.subr.bf16.mxu0 0
        %1175 = vmatpush2.bf16.msra.mxu0 %v914
        %1176 = vmatprep.subr.bf16.mxu0 0
        %1177 = vmatpush2.bf16.msra.mxu0 %v911
        %1178 = vmatprep.subr.bf16.mxu0 0
        %1179 = vmatpush2.bf16.msra.mxu0 %v908
        %1180 = vmatprep.subr.bf16.mxu0 0
        %1181 = vmatpush2.bf16.msra.mxu0 %v905
        %1182 = vmatprep.mubr.bf16.mxu0 %v506
        %1183 = vmatmul.mubr.bf16.gmra.mxu0 %v505
        %v1184 = vpop.f32.mrf.mxu0
        %v1185 = vadd.f32 %v1144, %v1184
        %v1186 = vpop.f32.mrf.mxu0
        %v1187 = vpop.f32.mrf.mxu0
        %v1188 = vadd.f32 %v1147, %v1187
        %v1189 = vpop.f32.mrf.mxu0
        %1190 = vdwg.mxu0
        %p1191 = scmp.eq.s32.totalorder %s340, 0
        %p1192 = scmp.eq.s32.totalorder %s341, 16
        %p1193 = pnand %p1191, %p1192
        %p1194 = pneg %p1193
        // Predicated region
        $region45: #{tpu_custom_call.1} parent=31 // pred_check
          _
        $region46: #{tpu_custom_call.1} parent=31 // pred_check_branch
          %1196 = sbr.rel (%p1193) target = $region48
        $region47: #{tpu_custom_call.1} parent=31 // pred_region
          %1197 = vst [vmem:[%s327] sm:$0xff] %v1101
          %1198 = vst [vmem:[%s327 + $0x8] sm:$0xff] %v1103
          %1199 = vst [vmem:[%s327 + $0x10] sm:$0xff] %v1185
          %1200 = vst [vmem:[%s327 + $0x18] sm:$0xff] %v1105
          %1201 = vst [vmem:[%s327 + $0x20] sm:$0xff] %v1107
          %1202 = vst [vmem:[%s327 + $0x28] sm:$0xff] %v1188
        $region48: #{tpu_custom_call.1} parent=31 // pred_fallthru
          _
        %p1203 = pneg %p1194
        // Predicated region
        $region49: #{tpu_custom_call.1} parent=31 // pred_check
          _
        $region50: #{tpu_custom_call.1} parent=31 // pred_check_branch
          %1205 = sbr.rel (%p1194) target = $region52
        $region51: #{tpu_custom_call.1} parent=31 // pred_region
          %v1206 = vlaneseq
          %v1207 = vshrl.u32 %v1206, 7
          %v1208 = vadd.s32 %v1207, 8
          %v1209 = vstv %s340
          %vm1210 = vcmp.ge.s32.totalorder %v1207, %v1209
          %vm1211 = vcmp.ge.s32.totalorder %v1208, %v1209
          %v1212 = vstv %s341
          %vm1213 = vcmp.lt.s32.totalorder %v1207, %v1212
          %vm1214 = vcmp.lt.s32.totalorder %v1208, %v1212
          %vm1215 = vmand %vm1210, %vm1213
          %vm1216 = vmand %vm1211, %vm1214
          %v1217 = vld [vmem:[%s327] sm:$0xff]
          %v1218 = vld [vmem:[%s327 + $0x8] sm:$0xff]
          %v1219 = vld [vmem:[%s327 + $0x10] sm:$0xff]
          %v1220 = vld [vmem:[%s327 + $0x18] sm:$0xff]
          %v1221 = vld [vmem:[%s327 + $0x20] sm:$0xff]
          %v1222 = vld [vmem:[%s327 + $0x28] sm:$0xff]
          %v1223 = vsel %vm1215, 1, 0
          %v1224 = vsel %vm1216, 1, 0
          %vm1225 = vcmp.eq.s32.totalorder %v1223, 1
          %vm1226 = vcmp.eq.s32.totalorder %v1224, 1
          %v1227 = vsel %vm1225, %v1101, %v1217
          %v1228 = vsel %vm1225, %v1103, %v1218
          %v1229 = vsel %vm1225, %v1185, %v1219
          %v1230 = vsel %vm1226, %v1105, %v1220
          %v1231 = vsel %vm1226, %v1107, %v1221
          %v1232 = vsel %vm1226, %v1188, %v1222
          %1233 = vst [vmem:[%s327] sm:$0xff] %v1227
          %1234 = vst [vmem:[%s327 + $0x8] sm:$0xff] %v1228
          %1235 = vst [vmem:[%s327 + $0x10] sm:$0xff] %v1229
          %1236 = vst [vmem:[%s327 + $0x18] sm:$0xff] %v1230
          %1237 = vst [vmem:[%s327 + $0x20] sm:$0xff] %v1231
          %1238 = vst [vmem:[%s327 + $0x28] sm:$0xff] %v1232
        $region52: #{tpu_custom_call.1} parent=31 // pred_fallthru
          _
        %s1239 = sand.u32 %s160, 1
        %s1240 = scalar_lea.sflag [#allocation9], %s1239
        %s1241 = sand.u32 %s160, 1
        %s1242 = smul.addr %s1241, 48
        %s1243 = scalar_lea.vmem [#allocation13], %s1242
        // Predicated region
        $region53: #{tpu_custom_call.1} parent=31 // pred_check
          %p1244 = pneg %p170
        $region54: #{tpu_custom_call.1} parent=31 // pred_check_branch
          %1246 = sbr.rel (%p1244) target = $region56
        $region55: #{tpu_custom_call.1} parent=31 // pred_region
          %s1247 = sld [smem:[#allocation3 + %s43]]
          %s1248 = smul.u32 2, %s1247
          %s1249 = smul.u32 3, %s42
          %s1251 = ssub.s32 768, 768
          %1252 = vsyncadd %s1240, %s1251
          %s1253 = smul.addr %s1248, 3
          %s1254 = sadd.s32 %s1249, %s1253
          %s1255 = smul.addr %s1254, 128
          %s1256 = scalar_lea.hbm %s7, %s1255
          %s1257 = sshll.u32 %s1243, 4
          %s1258 = int_to_ptr.vmem [resolvable:$true] %s1257
          %1263 = dma.vmem_to_hbm [thread:$0]  %s1258, 768, %s1256, %s1240, 384, 384, 24
        $region56: #{tpu_custom_call.1} parent=31 // pred_fallthru
          _
      $region32: #{tpu_custom_call.1} parent=5 // pred_fallthru
        _
      %p1264 = scmp.le.s32.totalorder 2, %s32
      // Predicated region
      $region57: #{tpu_custom_call.1} parent=5 // pred_check
        %p1265 = pneg %p1264
      $region58: #{tpu_custom_call.1} parent=5 // pred_check_branch
        %1267 = sbr.rel (%p1265) target = $region60
      $region59: #{tpu_custom_call.1} parent=5 // pred_region
        %s1268 = ssub.s32 %s32, 2
        // Predicated region
        $region61: #{tpu_custom_call.1} parent=59 // pred_check
          %p1269 = pneg %p176
        $region62: #{tpu_custom_call.1} parent=59 // pred_check_branch
          %1271 = sbr.rel (%p1269) target = $region64
        $region63: #{tpu_custom_call.1} parent=59 // pred_region
          %s1272 = sand.u32 %s161, 1
          %s1273 = scalar_lea.sflag [#allocation9], %s1272
          %s1274 = sand.u32 %s161, 1
          %s1275 = smul.addr %s1274, 48
          %s1276 = scalar_lea.vmem [#allocation13], %s1275
          %1277 = dma.done %s1273, 768
        $region64: #{tpu_custom_call.1} parent=59 // pred_fallthru
          _
      $region60: #{tpu_custom_call.1} parent=5 // pred_fallthru
        _
    $region6: #{tpu_custom_call.1} parent=1 // loop_footer
      %s36 = sadd.s32 1, %s32
    $region7: #{tpu_custom_call.1} parent=1 // loop_footer_branch
      %31 = sbr.rel target = $region3
    $region8: #{tpu_custom_call.1} parent=1 // loop_exit
      _
    %1278 = vsyncpa [#allocation8], 1
    %s1279 = scalar_lea.sflag [#allocation8], 1
    %1280 = vsyncpa %s1279, 1
    %1281 = vsyncpa [#allocation11], 1
    %s1282 = scalar_lea.sflag [#allocation11], 1
    %1283 = vsyncpa %s1282, 1
    %1284 = vsyncpa [#allocation9], 1
    %s1285 = scalar_lea.sflag [#allocation9], 1
    %1286 = vsyncpa %s1285, 1

</llo_original>
